<compile_context>
chip_gen: v7x
topology: tpu7x:2x2x1
jax: 0.10.0
libtpu: 0.0.40
codegen_flags: <defaults>
</compile_context>

<pallas_src>
import functools

import jax
import jax.numpy as jnp
from jax.experimental import pallas as pl
from jax.experimental.pallas import tpu as pltpu


def _leaky_hardtanh_kernel(x_ref, o_ref, *, min_val, max_val, lo_coef, hi_coef):
    # All parameters are plain Python floats (trace-time literals), so nothing
    # is captured as a JAX constant.
    x = x_ref[...]
    lo = jnp.minimum(x - min_val, 0.0)   # nonzero only where x < min_val
    hi = jnp.maximum(x - max_val, 0.0)   # nonzero only where x > max_val
    o_ref[...] = x + lo_coef * lo + hi_coef * hi


def leaky_hardtanh(x, min_val=-1.0, max_val=1.0, min_slope=0.01, max_slope=0.01,
                   *, lane=128, row_tile=2048):
    """Elementwise Leaky Hardtanh. Accepts any shape; returns same shape/dtype."""
    orig_shape = x.shape
    n = x.size

    # Flatten and (only if needed) pad once so rows is a multiple of 8.
    sub = 8
    n_pad = pl.cdiv(n, sub * lane) * sub * lane
    flat = jnp.reshape(x, (-1,))
    padded = n_pad != n
    if padded:
        flat = jnp.pad(flat, (0, n_pad - n))
    rows = n_pad // lane                      # multiple of 8
    slab = jnp.reshape(flat, (rows, lane))

    # Big blocks (~1 MiB f32) to approach HBM roofline; shrink for small inputs.
    tile_rows = min(row_tile, rows)           # both are multiples of 8
    grid = pl.cdiv(rows, tile_rows)           # Pallas masks a partial last block

    kernel = functools.partial(
        _leaky_hardtanh_kernel,
        min_val=float(min_val),
        max_val=float(max_val),
        lo_coef=float(min_slope) - 1.0,
        hi_coef=float(max_slope) - 1.0,
    )

    out = pl.pallas_call(
        kernel,
        out_shape=jax.ShapeDtypeStruct((rows, lane), slab.dtype),
        grid_spec=pltpu.PrefetchScalarGridSpec(
            num_scalar_prefetch=0,
            grid=(grid,),
            in_specs=[pl.BlockSpec((tile_rows, lane), lambda i: (i, 0))],
            out_specs=pl.BlockSpec((tile_rows, lane), lambda i: (i, 0)),
        ),
        compiler_params=pltpu.CompilerParams(
            dimension_semantics=("parallel",)),
    )(slab)

    if padded:
        out = jnp.reshape(out, (-1,))[:n]
    return jnp.reshape(out, orig_shape)


def leaky_hardtanh_ref(x, min_val=-1.0, max_val=1.0, min_slope=0.01, max_slope=0.01):
    # Direct transcription of the PyTorch formula.
    shifted = x - min_val
    lrelu = jnp.where(shifted >= 0, shifted, min_slope * shifted) + min_val
    upper = (x - max_val) * max_slope + max_val
    return jnp.where(x < max_val, lrelu, upper)


if __name__ == "__main__":
    key = jax.random.PRNGKey(0)
    # NCHW-shaped input, small: batch=2, channels=4, spatial=16x16
    x = jax.random.normal(key, (2, 4, 16, 16), dtype=jnp.float32) * 2.0

    out = leaky_hardtanh(x, min_val=-1.0, max_val=1.0, min_slope=0.01, max_slope=0.01)
    out = jax.block_until_ready(out)

    ref = leaky_hardtanh_ref(x)
    assert out.shape == x.shape and out.dtype == x.dtype
    assert jnp.allclose(out, ref, atol=1e-6, rtol=1e-5), "mismatch vs reference"
    print("KERNEL_OK")
</pallas_src>

<mosaic_0001>
module attributes {stable_mosaic.version = 11 : i64} {
  func.func @_leaky_hardtanh_kernel(%arg0: i32, %arg1: memref<16x128xf32, #tpu.memory_space<vmem>>, %arg2: memref<16x128xf32, #tpu.memory_space<vmem>>) attributes {dimension_semantics = [#tpu.dimension_semantics<parallel>], iteration_bounds = array<i64: 1>, scalar_prefetch = 0 : i64, scratch_operands = 0 : i64, tpu.core_type = #tpu.core_type<tc>, window_params = [{transform_indices = @transform_0, window_bounds = array<i64: 16, 128>}, {transform_indices = @transform_1, window_bounds = array<i64: 16, 128>}]} {
    %c0 = arith.constant 0 : index
    %c0_0 = arith.constant 0 : index
    %0 = vector.load %arg1[%c0, %c0_0] : memref<16x128xf32, #tpu.memory_space<vmem>>, vector<16x128xf32>
    %cst = arith.constant -1.000000e+00 : f32
    %1 = vector.broadcast %cst : f32 to vector<16x128xf32>
    %2 = arith.subf %0, %1 : vector<16x128xf32>
    %cst_1 = arith.constant 0.000000e+00 : f32
    %3 = vector.broadcast %cst_1 : f32 to vector<16x128xf32>
    %4 = arith.minimumf %2, %3 : vector<16x128xf32>
    %cst_2 = arith.constant 1.000000e+00 : f32
    %5 = vector.broadcast %cst_2 : f32 to vector<16x128xf32>
    %6 = arith.subf %0, %5 : vector<16x128xf32>
    %cst_3 = arith.constant 0.000000e+00 : f32
    %7 = vector.broadcast %cst_3 : f32 to vector<16x128xf32>
    %8 = arith.maximumf %6, %7 : vector<16x128xf32>
    %cst_4 = arith.constant -9.900000e-01 : f32
    %9 = vector.broadcast %cst_4 : f32 to vector<16x128xf32>
    %10 = arith.mulf %9, %4 : vector<16x128xf32>
    %11 = arith.addf %0, %10 : vector<16x128xf32>
    %cst_5 = arith.constant -9.900000e-01 : f32
    %12 = vector.broadcast %cst_5 : f32 to vector<16x128xf32>
    %13 = arith.mulf %12, %8 : vector<16x128xf32>
    %14 = arith.addf %11, %13 : vector<16x128xf32>
    %c0_6 = arith.constant 0 : index
    %c0_7 = arith.constant 0 : index
    %15 = vector.load %arg2[%c0_6, %c0_7] : memref<16x128xf32, #tpu.memory_space<vmem>>, vector<16x128xf32>
    tpu.vector_store %arg2[%c0_6, %c0_7], %14 {strides = array<i32>} : memref<16x128xf32, #tpu.memory_space<vmem>>, vector<16x128xf32>,
    return
  }
  func.func @transform_0(%arg0: i32) -> (i32, i32) {
    %c0_i32 = arith.constant 0 : i32
    %c0_i32_0 = arith.constant 0 : i32
    return %arg0, %c0_i32 : i32, i32
  }
  func.func @transform_1(%arg0: i32) -> (i32, i32) {
    %c0_i32 = arith.constant 0 : i32
    %c0_i32_0 = arith.constant 0 : i32
    return %arg0, %c0_i32 : i32, i32
  }
}

</mosaic_0001>

<llo_original>
// kernel: tpu_custom_call.1
$region0: #{tpu_custom_call.1}
  #allocation0 [shape = 'u32[]', space=smem, size = 0x4, offset = 0x4, fixed_abs, tag = 'smem constant byte address 0x4 - core index']
  #allocation1 [shape = 'u32[144,128]{1,0:T(1,128)}', space=vmem, size = 0x12000, scoped, tag = 'internal scratch']
  %s0 = inlined_call_operand.hbm [shape: f32[16,128], index: 0, kind: input, shape index: {}]
  %s1 = inlined_call_operand.hbm [shape: f32[16,128], index: 1, kind: output, shape index: {}]
  %s2 = sld [smem:[#allocation0]]
  $region18: #{tpu_custom_call.1} parent=0
    _
  %s4 = ssub.s32 1, %s2
  %s5 = scalar_select 0, %s4, %s2
  $region1: #{tpu_custom_call.1} parent=0
    #allocation2 [shape = 'u8[8192]{0}', space=vmem, size = 0x2000, scoped, tag = 'input window, operand 0, single buffered']
    #allocation3 [shape = 's32[1]{0}', space=sflag, size = 0x4, scoped, tag = 'scoped memory for tpu_custom_call.1']
    #allocation4 [shape = 's32[1]{0}', space=sflag, size = 0x4, scoped, tag = 'scoped memory for tpu_custom_call.1']
    #allocation5 [shape = 'u8[8192]{0}', space=vmem, size = 0x2000, scoped, tag = 'output window, operand 0, single buffered']
    %6 = vsyncpa [#allocation3], 0
    %7 = vsyncpa [#allocation4], 0
    // Predicated region
    $region2: #{tpu_custom_call.1} parent=1 // pred_check
      _
    $region3: #{tpu_custom_call.1} parent=1 // pred_check_branch
      %9 = sbr.rel (0) target = $region5
    $region4: #{tpu_custom_call.1} parent=1 // pred_region
      %s11 = ssub.s32 256, 256
      %12 = vsyncadd [#allocation3], %s11
      %s13 = sshll.u32 [#allocation2], 4
      %s14 = int_to_ptr.vmem [resolvable:$true] %s13
      %19 = dma.hbm_to_vmem [thread:$0]  %s0, 256, %s14, [#allocation3], 128, 128, 8
    $region5: #{tpu_custom_call.1} parent=1 // pred_fallthru
      _
    // Predicated region
    $region6: #{tpu_custom_call.1} parent=1 // pred_check
      _
    $region7: #{tpu_custom_call.1} parent=1 // pred_check_branch
      %21 = sbr.rel (0) target = $region9
    $region8: #{tpu_custom_call.1} parent=1 // pred_region
      %22 = dma.done [#allocation3], 256
    $region9: #{tpu_custom_call.1} parent=1 // pred_fallthru
      _
    %v23 = vld [vmem:[#allocation2] sm:$0xff]
    %v24 = vld [vmem:[#allocation2 + $0x8] sm:$0xff]
    %v25 = vsub.f32 %v23, -1.0
    %v26 = vsub.f32 %v24, -1.0
    %v27 = vmin.f32 %v25, 0.0
    %v28 = vmin.f32 %v26, 0.0
    %v29 = vsub.f32 %v23, 1.0
    %v30 = vsub.f32 %v24, 1.0
    %v31 = vmax.f32 %v29, 0.0
    %v32 = vmax.f32 %v30, 0.0
    %v33 = vmul.f32 %v27, -0.99
    %v34 = vmul.f32 %v28, -0.99
    %v35 = vadd.f32 %v23, %v33
    %v36 = vadd.f32 %v24, %v34
    %v37 = vmul.f32 %v31, -0.99
    %v38 = vmul.f32 %v32, -0.99
    %v39 = vadd.f32 %v35, %v37
    %v40 = vadd.f32 %v36, %v38
    %41 = vst [vmem:[#allocation5] sm:$0xff] %v39
    %42 = vst [vmem:[#allocation5 + $0x8] sm:$0xff] %v40
    // Predicated region
    $region10: #{tpu_custom_call.1} parent=1 // pred_check
      _
    $region11: #{tpu_custom_call.1} parent=1 // pred_check_branch
      %44 = sbr.rel (0) target = $region13
    $region12: #{tpu_custom_call.1} parent=1 // pred_region
      %s46 = ssub.s32 256, 256
      %47 = vsyncadd [#allocation4], %s46
      %s48 = sshll.u32 [#allocation5], 4
      %s49 = int_to_ptr.vmem [resolvable:$true] %s48
      %54 = dma.vmem_to_hbm [thread:$0]  %s49, 256, %s1, [#allocation4], 128, 128, 8
    $region13: #{tpu_custom_call.1} parent=1 // pred_fallthru
      _
    // Predicated region
    $region14: #{tpu_custom_call.1} parent=1 // pred_check
      _
    $region15: #{tpu_custom_call.1} parent=1 // pred_check_branch
      %56 = sbr.rel (0) target = $region17
    $region16: #{tpu_custom_call.1} parent=1 // pred_region
      %57 = dma.done [#allocation4], 256
    $region17: #{tpu_custom_call.1} parent=1 // pred_fallthru
      _
    %58 = vsyncpa [#allocation3], 1
    %59 = vsyncpa [#allocation4], 1

</llo_original>
